<compile_context>
chip_gen: v7x
topology: tpu7x:2x2x1
jax: 0.10.0
libtpu: 0.0.40
codegen_flags: <defaults>
</compile_context>

<pallas_src>
import jax
import jax.numpy as jnp
from jax.experimental import pallas as pl
from jax.experimental.pallas import tpu as pltpu

NUM_FEATURES = 192
PAD_FEATURES = 256          # output lanes padded 192 -> 256 (unmasked vst)
HIDDEN_DIM = 128
HIDDEN_FEATURES = 128
OUTPUT_DIM = 64
NUM_HEADS = 1
NEG_SLOPE = 0.2             # GATConv default negative_slope

# Packed small-vector layout: every slice starts on a 128-lane boundary.
_OFF_ATT_SRC = 0
_OFF_ATT_DST = _OFF_ATT_SRC + HIDDEN_FEATURES    # 128
_OFF_B1 = _OFF_ATT_DST + HIDDEN_FEATURES         # 256
_OFF_BG = _OFF_B1 + HIDDEN_DIM                   # 384
_OFF_BF = _OFF_BG + HIDDEN_FEATURES              # 512
_PVEC_LANES = _OFF_BF + PAD_FEATURES             # 768

# Packed weight matrix (shared 128-row contraction dim): [wg | W2F] -> [128, 384]
_WOFF_WG = 0
_WOFF_W2F = HIDDEN_FEATURES                      # 128
_WMAT_LANES = _WOFF_W2F + PAD_FEATURES           # 384


def contrastive_gcn_kernel(x_ref, a_norm_ref, w1_ref, wmat_ref, pvec_ref,
                           out_ref):
    f32 = jnp.float32
    bf16 = jnp.bfloat16

    x = x_ref[0]                         # [N, 192] bf16 (one graph)
    a_norm = a_norm_ref[0]               # [N, N]  f32  D^-1/2 (A+I) D^-1/2

    # Small parameters: one packed DMA, static 128-aligned lane slices (f32).
    att_src = pvec_ref[:, _OFF_ATT_SRC:_OFF_ATT_SRC + HIDDEN_FEATURES]  # [1,128]
    att_dst = pvec_ref[:, _OFF_ATT_DST:_OFF_ATT_DST + HIDDEN_FEATURES]  # [1,128]
    b1 = pvec_ref[:, _OFF_B1:_OFF_B1 + HIDDEN_DIM]                      # [1,128]
    bg = pvec_ref[:, _OFF_BG:_OFF_BG + HIDDEN_FEATURES]                 # [1,128]
    bF = pvec_ref[:, _OFF_BF:_OFF_BF + PAD_FEATURES]                    # [1,256]

    # Packed bf16 weights sharing the 128-row contraction dim.
    wg = wmat_ref[:, _WOFF_WG:_WOFF_WG + HIDDEN_FEATURES]               # [128,128]
    w2f = wmat_ref[:, _WOFF_W2F:_WOFF_W2F + PAD_FEATURES]               # [128,256]

    # ---- GCNConv(192 -> 128):  A_norm @ (x @ W1) + b1
    # bf16 operands, f32 accumulation; aggregation with a_norm stays f32.
    h = jnp.dot(x, w1_ref[...], preferred_element_type=f32)             # [N,128] f32
    h = jnp.dot(a_norm, h, preferred_element_type=f32) + b1

    # ---- GATConv(128 -> 128, heads=1, concat=True)
    hg = jnp.dot(h.astype(bf16), wg, preferred_element_type=f32)        # [N,128] f32
    a_d = jnp.sum(hg * att_dst, axis=-1, keepdims=True)                 # [N,1]
    a_s = jnp.sum(hg * att_src, axis=-1, keepdims=True)                 # [N,1]
    e = a_d + a_s.T                                                     # e[i,j] = a_d[i] + a_s[j]
    e = jnp.where(e > 0, e, NEG_SLOPE * e)                              # leaky_relu
    edge = a_norm > 0.0                                                 # A+I mask (f32 a_norm!)
    e = jnp.where(edge, e, -1e30)                                       # mask non-edges
    e = e - jnp.max(e, axis=-1, keepdims=True)                          # softmax over sources j
    p = jnp.exp(e)                                                      # masked entries underflow to 0
    # Self-loops guarantee >=1 unmasked entry per row, so the row sum is > 0.
    inv = pl.reciprocal(jnp.sum(p, axis=-1, keepdims=True))             # exact
    p = p * inv
    hg = jnp.dot(p, hg, preferred_element_type=f32) + bg                # f32 aggregation

    # ---- relu
    hr = jnp.maximum(hg, 0.0)

    # ---- GCNConv(128 -> 64) fused with Linear(64 -> 192):
    #      A_norm @ (hr @ (W2 @ Wf)) + (b2 @ Wf + bf), 256-lane padded output.
    h2 = jnp.dot(hr.astype(bf16), w2f, preferred_element_type=f32)      # [N,256] f32
    out_ref[0] = jnp.dot(a_norm, h2, preferred_element_type=f32) + bF


def _dense_graph_norm(edge_index, n):
    """GCN-normalized dense adjacency D^-1/2 (A+I) D^-1/2, A[dst, src]."""
    src, dst = edge_index[0], edge_index[1]
    a = jnp.zeros((n, n), jnp.float32).at[dst, src].set(1.0)
    a_hat = jnp.maximum(a, jnp.eye(n, dtype=jnp.float32))       # add self loops
    deg = jnp.sum(a_hat, axis=1)
    dinv = 1.0 / jnp.sqrt(deg)
    return a_hat * dinv[:, None] * dinv[None, :]


def pack_params(params):
    """One-time packing: fold fc2 into conv2, pad to 256 lanes, cast to bf16."""
    f32, bf16 = jnp.float32, jnp.bfloat16
    pad_f = PAD_FEATURES - NUM_FEATURES
    # Fold the final Linear into the second GCNConv (both are linear maps):
    #   (A @ (hr @ W2) + b2) @ Wf + bf == A @ (hr @ (W2 @ Wf)) + (b2 @ Wf + bf)
    w2f = params["w2"] @ params["wf"]                            # [128,192]
    bF = params["b2"] @ params["wf"] + params["bf"]              # [1,192]
    w2f = jnp.pad(w2f, ((0, 0), (0, pad_f)))                     # [128,256]
    bF = jnp.pad(bF, ((0, 0), (0, pad_f)))                       # [1,256]

    w1 = params["w1"].astype(bf16)                               # [192,128]
    wmat = jnp.concatenate([params["wg"], w2f], axis=1).astype(bf16)   # [128,384]
    assert wmat.shape == (HIDDEN_DIM, _WMAT_LANES)

    pvec = jnp.concatenate(
        [params["att_src"], params["att_dst"], params["b1"], params["bg"], bF],
        axis=1).astype(f32)                                      # [1,768]
    assert pvec.shape == (1, _PVEC_LANES)
    return {"w1": w1, "wmat": wmat, "pvec": pvec}


def contrastive_gcn_forward(x, a_norm, packed):
    """x: [G, N, 192] f32, a_norm: [G, N, N] f32 (GCN-normalized, self-loops)."""
    g, n, _ = x.shape
    # bf16 MXU feed (halves x DMA bytes); could equally be done at data-prep time.
    x_bf = x.astype(jnp.bfloat16)

    out_pad = pl.pallas_call(
        contrastive_gcn_kernel,
        out_shape=jax.ShapeDtypeStruct((g, n, PAD_FEATURES), jnp.float32),
        grid_spec=pltpu.PrefetchScalarGridSpec(
            num_scalar_prefetch=0,
            grid=(g,),
            in_specs=[
                pl.BlockSpec((1, n, NUM_FEATURES), lambda i: (i, 0, 0)),   # x
                pl.BlockSpec((1, n, n), lambda i: (i, 0, 0)),              # a_norm
                # Weights: constant block index -> stay VMEM-resident across grid.
                pl.BlockSpec((NUM_FEATURES, HIDDEN_DIM), lambda i: (0, 0)),      # w1
                pl.BlockSpec((HIDDEN_DIM, _WMAT_LANES), lambda i: (0, 0)),       # wg|W2F
                pl.BlockSpec((1, _PVEC_LANES), lambda i: (0, 0)),                # pvec
            ],
            out_specs=pl.BlockSpec((1, n, PAD_FEATURES), lambda i: (i, 0, 0)),
        ),
        compiler_params=pltpu.CompilerParams(
            dimension_semantics=("parallel",),        # shard graphs across v7x TCs
            vmem_limit_bytes=32 * 1024 * 1024,
        ),
    )(x_bf, a_norm, packed["w1"], packed["wmat"], packed["pvec"])
    return out_pad[:, :, :NUM_FEATURES]


def reference_forward_single(x, a_norm, params):
    """Pure-JAX f32 mirror of one graph (PyG GCNConv/GATConv dense semantics)."""
    h = a_norm @ (x @ params["w1"]) + params["b1"]
    hg = h @ params["wg"]
    a_s = jnp.sum(hg * params["att_src"], -1)
    a_d = jnp.sum(hg * params["att_dst"], -1)
    e = a_d[:, None] + a_s[None, :]
    e = jnp.where(e > 0, e, NEG_SLOPE * e)
    mask = a_norm > 0
    e = jnp.where(mask, e, -1e30)
    e = e - jnp.max(e, axis=-1, keepdims=True)
    p = jnp.exp(e) * mask
    p = p / jnp.sum(p, -1, keepdims=True)
    hg = p @ hg + params["bg"]
    hr = jnp.maximum(hg, 0.0)
    h2 = a_norm @ (hr @ params["w2"]) + params["b2"]
    return h2 @ params["wf"] + params["bf"]


def init_params(key):
    ks = jax.random.split(key, 7)

    def glorot(k, shape):
        lim = (6.0 / (shape[0] + shape[1])) ** 0.5
        return jax.random.uniform(k, shape, jnp.float32, -lim, lim)

    return {
        # GCNConv(192, 128): Linear(no bias) weight + separate bias
        "w1": glorot(ks[0], (NUM_FEATURES, HIDDEN_DIM)),
        "b1": jnp.zeros((1, HIDDEN_DIM), jnp.float32),
        # GATConv(128, 128, heads=1): lin weight, att_src, att_dst, bias
        "wg": glorot(ks[1], (HIDDEN_DIM, HIDDEN_FEATURES * NUM_HEADS)),
        "att_src": glorot(ks[2], (1, HIDDEN_FEATURES * NUM_HEADS)),
        "att_dst": glorot(ks[3], (1, HIDDEN_FEATURES * NUM_HEADS)),
        "bg": jnp.zeros((1, HIDDEN_FEATURES * NUM_HEADS), jnp.float32),
        # GCNConv(128, 64)
        "w2": glorot(ks[4], (HIDDEN_FEATURES, OUTPUT_DIM)),
        "b2": jnp.zeros((1, OUTPUT_DIM), jnp.float32),
        # nn.Linear(64, 192): stored pre-transposed as [64, 192]
        "wf": glorot(ks[5], (OUTPUT_DIM, NUM_FEATURES)),
        "bf": jax.random.uniform(ks[6], (1, NUM_FEATURES), jnp.float32, -0.1, 0.1),
    }


if __name__ == "__main__":
    key = jax.random.PRNGKey(0)
    kx, kp = jax.random.split(key)

    G, N = 8, 8                       # batch of 8 tiny graphs, 8 nodes each
    x = jax.random.normal(kx, (G, N, NUM_FEATURES), jnp.float32)

    # Per-graph edge_index (PyG convention: row0=src, row1=dst): a bidirectional
    # ring plus one graph-specific chord so the graphs differ.
    idx = jnp.arange(N, dtype=jnp.int32)
    ring_src = jnp.concatenate([idx, (idx + 1) % N])
    ring_dst = jnp.concatenate([(idx + 1) % N, idx])
    edge_indices = []
    for g in range(G):
        ca = jnp.array([g % N], jnp.int32)
        cb = jnp.array([(g + 3) % N], jnp.int32)
        src = jnp.concatenate([ring_src, ca, cb])
        dst = jnp.concatenate([ring_dst, cb, ca])
        edge_indices.append(jnp.stack([src, dst]))
    edge_index = jnp.stack(edge_indices)                    # [G, 2, 2N+2]

    a_norm = jax.vmap(_dense_graph_norm, in_axes=(0, None))(edge_index, N)

    params = init_params(kp)
    packed = pack_params(params)      # one-time fold/pad/bf16-cast of the weights

    out = contrastive_gcn_forward(x, a_norm, packed)
    out = jax.block_until_ready(out)

    ref = jax.vmap(reference_forward_single, in_axes=(0, 0, None))(x, a_norm, params)
    assert out.shape == (G, N, NUM_FEATURES)
    assert bool(jnp.all(jnp.isfinite(out)))
    # Tolerance accounts for bf16 MXU operands (f32 accumulation) vs. the
    # pure-f32 reference; softmax reciprocal is exact.
    assert bool(jnp.allclose(out, ref, atol=5e-2, rtol=5e-2))
    print("KERNEL_OK")
</pallas_src>

<mosaic_0001>
module attributes {stable_mosaic.version = 11 : i64} {
  func.func @contrastive_gcn_kernel(%arg0: i32, %arg1: memref<1x8x192xbf16, #tpu.memory_space<vmem>>, %arg2: memref<1x8x8xf32, #tpu.memory_space<vmem>>, %arg3: memref<192x128xbf16, #tpu.memory_space<vmem>>, %arg4: memref<128x384xbf16, #tpu.memory_space<vmem>>, %arg5: memref<1x768xf32, #tpu.memory_space<vmem>>, %arg6: memref<1x8x256xf32, #tpu.memory_space<vmem>>) attributes {dimension_semantics = [#tpu.dimension_semantics<parallel>], iteration_bounds = array<i64: 8>, scalar_prefetch = 0 : i64, scratch_operands = 0 : i64, tpu.core_type = #tpu.core_type<tc>, window_params = [{transform_indices = @transform_0, window_bounds = array<i64: 1, 8, 192>}, {transform_indices = @transform_1, window_bounds = array<i64: 1, 8, 8>}, {pipeline_mode = #tpu.pipeline_mode<synchronous>, transform_indices = @transform_2, window_bounds = array<i64: 192, 128>}, {pipeline_mode = #tpu.pipeline_mode<synchronous>, transform_indices = @transform_3, window_bounds = array<i64: 128, 384>}, {pipeline_mode = #tpu.pipeline_mode<synchronous>, transform_indices = @transform_4, window_bounds = array<i64: 1, 768>}, {transform_indices = @transform_5, window_bounds = array<i64: 1, 8, 256>}]} {
    %c0 = arith.constant 0 : index
    %c0_0 = arith.constant 0 : index
    %c0_1 = arith.constant 0 : index
    %0 = vector.load %arg1[%c0, %c0_0, %c0_1] : memref<1x8x192xbf16, #tpu.memory_space<vmem>>, vector<1x8x192xbf16>
    %1 = vector.shape_cast %0 : vector<1x8x192xbf16> to vector<8x192xbf16>
    %c0_2 = arith.constant 0 : index
    %c0_3 = arith.constant 0 : index
    %c0_4 = arith.constant 0 : index
    %2 = vector.load %arg2[%c0_2, %c0_3, %c0_4] : memref<1x8x8xf32, #tpu.memory_space<vmem>>, vector<1x8x8xf32>
    %3 = vector.shape_cast %2 : vector<1x8x8xf32> to vector<8x8xf32>
    %c0_5 = arith.constant 0 : index
    %c0_6 = arith.constant 0 : index
    %4 = vector.load %arg5[%c0_5, %c0_6] : memref<1x768xf32, #tpu.memory_space<vmem>>, vector<1x128xf32>
    %c0_7 = arith.constant 0 : index
    %c128 = arith.constant 128 : index
    %5 = vector.load %arg5[%c0_7, %c128] : memref<1x768xf32, #tpu.memory_space<vmem>>, vector<1x128xf32>
    %c0_8 = arith.constant 0 : index
    %c256 = arith.constant 256 : index
    %6 = vector.load %arg5[%c0_8, %c256] : memref<1x768xf32, #tpu.memory_space<vmem>>, vector<1x128xf32>
    %c0_9 = arith.constant 0 : index
    %c384 = arith.constant 384 : index
    %7 = vector.load %arg5[%c0_9, %c384] : memref<1x768xf32, #tpu.memory_space<vmem>>, vector<1x128xf32>
    %c0_10 = arith.constant 0 : index
    %c512 = arith.constant 512 : index
    %8 = vector.load %arg5[%c0_10, %c512] : memref<1x768xf32, #tpu.memory_space<vmem>>, vector<1x256xf32>
    %c0_11 = arith.constant 0 : index
    %c0_12 = arith.constant 0 : index
    %9 = vector.load %arg4[%c0_11, %c0_12] : memref<128x384xbf16, #tpu.memory_space<vmem>>, vector<128x128xbf16>
    %c0_13 = arith.constant 0 : index
    %c128_14 = arith.constant 128 : index
    %10 = vector.load %arg4[%c0_13, %c128_14] : memref<128x384xbf16, #tpu.memory_space<vmem>>, vector<128x256xbf16>
    %c0_15 = arith.constant 0 : index
    %c0_16 = arith.constant 0 : index
    %11 = vector.load %arg3[%c0_15, %c0_16] : memref<192x128xbf16, #tpu.memory_space<vmem>>, vector<192x128xbf16>
    %cst = arith.constant dense<0.000000e+00> : vector<8x128xf32>
    %12 = tpu.matmul %1, %11, %cst {dimension_numbers = #tpu.dot_dimension_numbers<[1], [0], [0], [1], [0, 0, 1, 1], [], []>} : vector<8x192xbf16>, vector<192x128xbf16>, vector<8x128xf32> -> vector<8x128xf32>
    %cst_17 = arith.constant dense<0.000000e+00> : vector<8x128xf32>
    %13 = tpu.matmul %3, %12, %cst_17 {dimension_numbers = #tpu.dot_dimension_numbers<[1], [0], [0], [1], [0, 0, 1, 1], [], []>} : vector<8x8xf32>, vector<8x128xf32>, vector<8x128xf32> -> vector<8x128xf32>
    %14 = vector.broadcast %6 : vector<1x128xf32> to vector<8x128xf32>
    %15 = arith.addf %13, %14 : vector<8x128xf32>
    %16 = arith.truncf %15 : vector<8x128xf32> to vector<8x128xbf16>
    %cst_18 = arith.constant dense<0.000000e+00> : vector<8x128xf32>
    %17 = tpu.matmul %16, %9, %cst_18 {dimension_numbers = #tpu.dot_dimension_numbers<[1], [0], [0], [1], [0, 0, 1, 1], [], []>} : vector<8x128xbf16>, vector<128x128xbf16>, vector<8x128xf32> -> vector<8x128xf32>
    %18 = vector.broadcast %5 : vector<1x128xf32> to vector<8x128xf32>
    %19 = arith.mulf %17, %18 : vector<8x128xf32>
    %cst_19 = arith.constant dense<0.000000e+00> : vector<8xf32>
    %20 = vector.multi_reduction <add>, %19, %cst_19 [1] : vector<8x128xf32> to vector<8xf32>
    %21 = vector.shape_cast %20 : vector<8xf32> to vector<8x1xf32>
    %22 = vector.broadcast %4 : vector<1x128xf32> to vector<8x128xf32>
    %23 = arith.mulf %17, %22 : vector<8x128xf32>
    %cst_20 = arith.constant dense<0.000000e+00> : vector<8xf32>
    %24 = vector.multi_reduction <add>, %23, %cst_20 [1] : vector<8x128xf32> to vector<8xf32>
    %25 = vector.shape_cast %24 : vector<8xf32> to vector<8x1xf32>
    %26 = tpu.transpose %25, [1, 0] : vector<8x1xf32> -> vector<1x8xf32>
    %27 = vector.broadcast %21 : vector<8x1xf32> to vector<8x8xf32>
    %28 = vector.broadcast %26 : vector<1x8xf32> to vector<8x8xf32>
    %29 = arith.addf %27, %28 : vector<8x8xf32>
    %cst_21 = arith.constant 0.000000e+00 : f32
    %30 = vector.broadcast %cst_21 : f32 to vector<8x8xf32>
    %31 = arith.cmpf ogt, %29, %30 : vector<8x8xf32>
    %cst_22 = arith.constant 2.000000e-01 : f32
    %32 = vector.broadcast %cst_22 : f32 to vector<8x8xf32>
    %33 = arith.mulf %32, %29 : vector<8x8xf32>
    %34 = arith.select %31, %29, %33 : vector<8x8xi1>, vector<8x8xf32>
    %cst_23 = arith.constant 0.000000e+00 : f32
    %35 = vector.broadcast %cst_23 : f32 to vector<8x8xf32>
    %36 = arith.cmpf ogt, %3, %35 : vector<8x8xf32>
    %cst_24 = arith.constant -1.000000e+30 : f32
    %37 = vector.broadcast %cst_24 : f32 to vector<8x8xf32>
    %38 = arith.select %36, %34, %37 : vector<8x8xi1>, vector<8x8xf32>
    %cst_25 = arith.constant dense<0xFF800000> : vector<8xf32>
    %39 = vector.multi_reduction <maximumf>, %38, %cst_25 [1] : vector<8x8xf32> to vector<8xf32>
    %40 = vector.shape_cast %39 : vector<8xf32> to vector<8x1xf32>
    %41 = vector.broadcast %40 : vector<8x1xf32> to vector<8x8xf32>
    %42 = arith.subf %38, %41 : vector<8x8xf32>
    %43 = math.exp %42 : vector<8x8xf32>
    %cst_26 = arith.constant dense<0.000000e+00> : vector<8xf32>
    %44 = vector.multi_reduction <add>, %43, %cst_26 [1] : vector<8x8xf32> to vector<8xf32>
    %45 = vector.shape_cast %44 : vector<8xf32> to vector<8x1xf32>
    %46 = tpu.reciprocal %45 : vector<8x1xf32> -> vector<8x1xf32>
    %47 = vector.broadcast %46 : vector<8x1xf32> to vector<8x8xf32>
    %48 = arith.mulf %43, %47 : vector<8x8xf32>
    %cst_27 = arith.constant dense<0.000000e+00> : vector<8x128xf32>
    %49 = tpu.matmul %48, %17, %cst_27 {dimension_numbers = #tpu.dot_dimension_numbers<[1], [0], [0], [1], [0, 0, 1, 1], [], []>} : vector<8x8xf32>, vector<8x128xf32>, vector<8x128xf32> -> vector<8x128xf32>
    %50 = vector.broadcast %7 : vector<1x128xf32> to vector<8x128xf32>
    %51 = arith.addf %49, %50 : vector<8x128xf32>
    %cst_28 = arith.constant 0.000000e+00 : f32
    %52 = vector.broadcast %cst_28 : f32 to vector<8x128xf32>
    %53 = arith.maximumf %51, %52 : vector<8x128xf32>
    %54 = arith.truncf %53 : vector<8x128xf32> to vector<8x128xbf16>
    %cst_29 = arith.constant dense<0.000000e+00> : vector<8x256xf32>
    %55 = tpu.matmul %54, %10, %cst_29 {dimension_numbers = #tpu.dot_dimension_numbers<[1], [0], [0], [1], [0, 0, 1, 1], [], []>} : vector<8x128xbf16>, vector<128x256xbf16>, vector<8x256xf32> -> vector<8x256xf32>
    %cst_30 = arith.constant dense<0.000000e+00> : vector<8x256xf32>
    %56 = tpu.matmul %3, %55, %cst_30 {dimension_numbers = #tpu.dot_dimension_numbers<[1], [0], [0], [1], [0, 0, 1, 1], [], []>} : vector<8x8xf32>, vector<8x256xf32>, vector<8x256xf32> -> vector<8x256xf32>
    %57 = vector.broadcast %8 : vector<1x256xf32> to vector<8x256xf32>
    %58 = arith.addf %56, %57 : vector<8x256xf32>
    %c0_31 = arith.constant 0 : index
    %c0_32 = arith.constant 0 : index
    %c0_33 = arith.constant 0 : index
    %59 = vector.load %arg6[%c0_31, %c0_32, %c0_33] : memref<1x8x256xf32, #tpu.memory_space<vmem>>, vector<1x8x256xf32>
    %60 = vector.shape_cast %59 : vector<1x8x256xf32> to vector<8x256xf32>
    %61 = vector.shape_cast %58 : vector<8x256xf32> to vector<1x8x256xf32>
    tpu.vector_store %arg6[%c0_31, %c0_32, %c0_33], %61 {strides = array<i32>} : memref<1x8x256xf32, #tpu.memory_space<vmem>>, vector<1x8x256xf32>,
    return
  }
  func.func @transform_0(%arg0: i32) -> (i32, i32, i32) {
    %c0_i32 = arith.constant 0 : i32
    %c0_i32_0 = arith.constant 0 : i32
    %c0_i32_1 = arith.constant 0 : i32
    return %arg0, %c0_i32, %c0_i32_0 : i32, i32, i32
  }
  func.func @transform_1(%arg0: i32) -> (i32, i32, i32) {
    %c0_i32 = arith.constant 0 : i32
    %c0_i32_0 = arith.constant 0 : i32
    %c0_i32_1 = arith.constant 0 : i32
    return %arg0, %c0_i32, %c0_i32_0 : i32, i32, i32
  }
  func.func @transform_2(%arg0: i32) -> (i32, i32) {
    %c0_i32 = arith.constant 0 : i32
    %c0_i32_0 = arith.constant 0 : i32
    %c0_i32_1 = arith.constant 0 : i32
    return %c0_i32, %c0_i32_0 : i32, i32
  }
  func.func @transform_3(%arg0: i32) -> (i32, i32) {
    %c0_i32 = arith.constant 0 : i32
    %c0_i32_0 = arith.constant 0 : i32
    %c0_i32_1 = arith.constant 0 : i32
    return %c0_i32, %c0_i32_0 : i32, i32
  }
  func.func @transform_4(%arg0: i32) -> (i32, i32) {
    %c0_i32 = arith.constant 0 : i32
    %c0_i32_0 = arith.constant 0 : i32
    %c0_i32_1 = arith.constant 0 : i32
    return %c0_i32, %c0_i32_0 : i32, i32
  }
  func.func @transform_5(%arg0: i32) -> (i32, i32, i32) {
    %c0_i32 = arith.constant 0 : i32
    %c0_i32_0 = arith.constant 0 : i32
    %c0_i32_1 = arith.constant 0 : i32
    return %arg0, %c0_i32, %c0_i32_0 : i32, i32, i32
  }
}

</mosaic_0001>

<llo_original>
// kernel: tpu_custom_call.1
$region0: #{tpu_custom_call.1}
  #allocation0 [shape = 'u32[]', space=smem, size = 0x4, offset = 0x4, fixed_abs, tag = 'smem constant byte address 0x4 - core index']
  #allocation1 [shape = 'u32[144,128]{1,0:T(1,128)}', space=vmem, size = 0x12000, scoped, tag = 'internal scratch']
  %s0 = inlined_call_operand.hbm [shape: bf16[8,8,192], index: 0, kind: input, shape index: {}]
  %s1 = inlined_call_operand.hbm [shape: f32[8,8,8], index: 1, kind: input, shape index: {}]
  %s2 = inlined_call_operand.hbm [shape: bf16[192,128], index: 2, kind: input, shape index: {}]
  %s3 = inlined_call_operand.hbm [shape: bf16[128,384], index: 3, kind: input, shape index: {}]
  %s4 = inlined_call_operand.vmem [shape: f32[1,768], index: 4, kind: input, shape index: {}]
  %s5 = inlined_call_operand.hbm [shape: f32[8,8,256], index: 5, kind: output, shape index: {}]
  %s6 = sld [smem:[#allocation0]]
  $region69: #{tpu_custom_call.1} parent=0
    _
  %s8 = ssub.s32 1, %s6
  %s9 = scalar_select 0, %s8, %s6
  $region1: #{tpu_custom_call.1} parent=0
    #allocation2 [shape = 'u8[8192]{0}', space=vmem, size = 0x2000, scoped, tag = 'input window, operand 0']
    #allocation3 [shape = 's32[2]{0}', space=sflag, size = 0x8, scoped, tag = 'scoped memory for tpu_custom_call.1']
    #allocation4 [shape = 's32[2]{0}', space=sflag, size = 0x8, scoped, tag = 'scoped memory for tpu_custom_call.1']
    #allocation5 [shape = 'u8[8192]{0}', space=vmem, size = 0x2000, scoped, tag = 'input window, operand 1']
    #allocation6 [shape = 's32[2]{0}', space=sflag, size = 0x8, scoped, tag = 'scoped memory for tpu_custom_call.1']
    #allocation7 [shape = 'u8[49152]{0}', space=vmem, size = 0xc000, scoped, tag = 'input window, operand 2, single buffered']
    #allocation8 [shape = 'u8[98304]{0}', space=vmem, size = 0x18000, scoped, tag = 'input window, operand 3, single buffered']
    #allocation9 [shape = 's32[1]{0}', space=sflag, size = 0x4, scoped, tag = 'scoped memory for tpu_custom_call.1']
    #allocation10 [shape = 'u8[16384]{0}', space=vmem, size = 0x4000, scoped, tag = 'output window, operand 0']
    %10 = vsyncpa [#allocation3], 0
    %s11 = scalar_lea.sflag [#allocation3], 1
    %12 = vsyncpa %s11, 0
    %13 = vsyncpa [#allocation6], 0
    %s14 = scalar_lea.sflag [#allocation6], 1
    %15 = vsyncpa %s14, 0
    %16 = vsyncpa [#allocation9], 0
    %17 = vsyncpa [#allocation4], 0
    %s18 = scalar_lea.sflag [#allocation4], 1
    %19 = vsyncpa %s18, 0
    loop: start=0, step=1, limit=10
    $region2: #{tpu_custom_call.1} parent=1 // loop_pre_header
      _
    $region3: #{tpu_custom_call.1} parent=1 // loop_header
      %s21 = sphi 0, %s25
      %p22 = scmp.ge.s32.totalorder %s21, 10
      %s31 = sphi 0, %s33
      %s34 = sphi 0, %s31
      %s35 = sphi 0, %s34
      %s51 = sphi 0, %s35
      %s57 = sphi 0, %s59
      %s60 = sphi 0, %s57
      %s61 = sphi 0, %s60
      %s77 = sphi 0, %s61
      %s81 = sphi 0, %s81
      %s83 = sphi 0, %s81
      %s84 = sphi 0, %s83
      %s98 = sphi 0, %s84
      %s102 = sphi 0, %s102
      %s104 = sphi 0, %s102
      %s105 = sphi 0, %s104
      %s119 = sphi 0, %s105
      %s123 = sphi 0, %s123
      %s125 = sphi 0, %s123
      %s126 = sphi 0, %s125
      %s140 = sphi 0, %s126
      %s146 = sphi 0, %s148
      %s149 = sphi 0, %s146
      %s150 = sphi 0, %s149
      %s166 = sphi 0, %s150
    $region4: #{tpu_custom_call.1} parent=1 // loop_header_branch
      %24 = sbr.rel (%p22) target = $region8
    $region5: #{tpu_custom_call.1} parent=1 // loop_body
      %s26 = ssub.s32 %s21, 1
      %s27 = ssub.s32 %s21, 2
      %s28 = sadd.s32 %s21, 1
      %s29 = ssub.s32 %s21, %s28
      %p30 = scmp.eq.s32.totalorder %s29, 0
      %s32 = sadd.s32 %s31, 1
      %s33 = scalar_select %p30, %s31, %s32
      %p36 = pneg %p30
      %p37 = scmp.eq.s32.totalorder %s21, 7
      %p38 = por %p36, %p37
      %p39 = scmp.ne.s32.totalorder %s31, %s34
      %p40 = scmp.eq.s32.totalorder %s21, 0
      %p41 = por %p39, %p40
      %p42 = scmp.ne.s32.totalorder %s31, %s34
      %p43 = scmp.eq.s32.totalorder %s26, 7
      %p44 = por %p42, %p43
      %p45 = scmp.ne.s32.totalorder %s34, %s35
      %p46 = scmp.eq.s32.totalorder %s26, 0
      %p47 = por %p45, %p46
      %p48 = scmp.ne.s32.totalorder %s34, %s35
      %p49 = scmp.eq.s32.totalorder %s27, 7
      %p50 = por %p48, %p49
      %p52 = scmp.ne.s32.totalorder %s35, %s51
      %p53 = scmp.eq.s32.totalorder %s27, 0
      %p54 = por %p52, %p53
      %s55 = ssub.s32 %s21, %s28
      %p56 = scmp.eq.s32.totalorder %s55, 0
      %s58 = sadd.s32 %s57, 1
      %s59 = scalar_select %p56, %s57, %s58
      %p62 = pneg %p56
      %p63 = scmp.eq.s32.totalorder %s21, 7
      %p64 = por %p62, %p63
      %p65 = scmp.ne.s32.totalorder %s57, %s60
      %p66 = scmp.eq.s32.totalorder %s21, 0
      %p67 = por %p65, %p66
      %p68 = scmp.ne.s32.totalorder %s57, %s60
      %p69 = scmp.eq.s32.totalorder %s26, 7
      %p70 = por %p68, %p69
      %p71 = scmp.ne.s32.totalorder %s60, %s61
      %p72 = scmp.eq.s32.totalorder %s26, 0
      %p73 = por %p71, %p72
      %p74 = scmp.ne.s32.totalorder %s60, %s61
      %p75 = scmp.eq.s32.totalorder %s27, 7
      %p76 = por %p74, %p75
      %p78 = scmp.ne.s32.totalorder %s61, %s77
      %p79 = scmp.eq.s32.totalorder %s27, 0
      %p80 = por %p78, %p79
      %s82 = sadd.s32 %s81, 1
      %p85 = scmp.eq.s32.totalorder %s21, 7
      %p86 = scmp.ne.s32.totalorder %s81, %s83
      %p87 = scmp.eq.s32.totalorder %s21, 0
      %p88 = por %p86, %p87
      %p89 = scmp.ne.s32.totalorder %s81, %s83
      %p90 = scmp.eq.s32.totalorder %s26, 7
      %p91 = por %p89, %p90
      %p92 = scmp.ne.s32.totalorder %s83, %s84
      %p93 = scmp.eq.s32.totalorder %s26, 0
      %p94 = por %p92, %p93
      %p95 = scmp.ne.s32.totalorder %s83, %s84
      %p96 = scmp.eq.s32.totalorder %s27, 7
      %p97 = por %p95, %p96
      %p99 = scmp.ne.s32.totalorder %s84, %s98
      %p100 = scmp.eq.s32.totalorder %s27, 0
      %p101 = por %p99, %p100
      %s103 = sadd.s32 %s102, 1
      %p106 = scmp.eq.s32.totalorder %s21, 7
      %p107 = scmp.ne.s32.totalorder %s102, %s104
      %p108 = scmp.eq.s32.totalorder %s21, 0
      %p109 = por %p107, %p108
      %p110 = scmp.ne.s32.totalorder %s102, %s104
      %p111 = scmp.eq.s32.totalorder %s26, 7
      %p112 = por %p110, %p111
      %p113 = scmp.ne.s32.totalorder %s104, %s105
      %p114 = scmp.eq.s32.totalorder %s26, 0
      %p115 = por %p113, %p114
      %p116 = scmp.ne.s32.totalorder %s104, %s105
      %p117 = scmp.eq.s32.totalorder %s27, 7
      %p118 = por %p116, %p117
      %p120 = scmp.ne.s32.totalorder %s105, %s119
      %p121 = scmp.eq.s32.totalorder %s27, 0
      %p122 = por %p120, %p121
      %s124 = sadd.s32 %s123, 1
      %p127 = scmp.eq.s32.totalorder %s21, 7
      %p128 = scmp.ne.s32.totalorder %s123, %s125
      %p129 = scmp.eq.s32.totalorder %s21, 0
      %p130 = por %p128, %p129
      %p131 = scmp.ne.s32.totalorder %s123, %s125
      %p132 = scmp.eq.s32.totalorder %s26, 7
      %p133 = por %p131, %p132
      %p134 = scmp.ne.s32.totalorder %s125, %s126
      %p135 = scmp.eq.s32.totalorder %s26, 0
      %p136 = por %p134, %p135
      %p137 = scmp.ne.s32.totalorder %s125, %s126
      %p138 = scmp.eq.s32.totalorder %s27, 7
      %p139 = por %p137, %p138
      %p141 = scmp.ne.s32.totalorder %s126, %s140
      %p142 = scmp.eq.s32.totalorder %s27, 0
      %p143 = por %p141, %p142
      %s144 = ssub.s32 %s21, %s28
      %p145 = scmp.eq.s32.totalorder %s144, 0
      %s147 = sadd.s32 %s146, 1
      %s148 = scalar_select %p145, %s146, %s147
      %p151 = pneg %p145
      %p152 = scmp.eq.s32.totalorder %s21, 7
      %p153 = por %p151, %p152
      %p154 = scmp.ne.s32.totalorder %s146, %s149
      %p155 = scmp.eq.s32.totalorder %s21, 0
      %p156 = por %p154, %p155
      %p157 = scmp.ne.s32.totalorder %s146, %s149
      %p158 = scmp.eq.s32.totalorder %s26, 7
      %p159 = por %p157, %p158
      %p160 = scmp.ne.s32.totalorder %s149, %s150
      %p161 = scmp.eq.s32.totalorder %s26, 0
      %p162 = por %p160, %p161
      %p163 = scmp.ne.s32.totalorder %s149, %s150
      %p164 = scmp.eq.s32.totalorder %s27, 7
      %p165 = por %p163, %p164
      %p167 = scmp.ne.s32.totalorder %s150, %s166
      %p168 = scmp.eq.s32.totalorder %s27, 0
      %p169 = por %p167, %p168
      %p170 = scmp.le.s32.totalorder 1, %s21
      %p171 = scmp.lt.s32.totalorder %s21, 9
      %p172 = pnand %p170, %p171
      %p173 = pneg %p172
      // Predicated region
      $region9: #{tpu_custom_call.1} parent=5 // pred_check
        _
      $region10: #{tpu_custom_call.1} parent=5 // pred_check_branch
        %175 = sbr.rel (%p172) target = $region12
      $region11: #{tpu_custom_call.1} parent=5 // pred_region
        %s176 = ssub.s32 %s21, 1
        // Predicated region
        $region13: #{tpu_custom_call.1} parent=11 // pred_check
          %p177 = pneg %p94
        $region14: #{tpu_custom_call.1} parent=11 // pred_check_branch
          %179 = sbr.rel (%p177) target = $region16
        $region15: #{tpu_custom_call.1} parent=11 // pred_region
          %s181 = ssub.s32 1536, 1536
          %182 = vsyncadd [#allocation6], %s181
          %s183 = sshll.u32 [#allocation7], 4
          %s184 = int_to_ptr.vmem [resolvable:$true] %s183
          %189 = dma.hbm_to_vmem [thread:$0]  %s2, 1536, %s184, [#allocation6], 64, 64, 4
        $region16: #{tpu_custom_call.1} parent=11 // pred_fallthru
          _
        // Predicated region
        $region17: #{tpu_custom_call.1} parent=11 // pred_check
          %p190 = pneg %p115
        $region18: #{tpu_custom_call.1} parent=11 // pred_check_branch
          %192 = sbr.rel (%p190) target = $region20
        $region19: #{tpu_custom_call.1} parent=11 // pred_region
          %s194 = ssub.s32 3072, 3072
          %195 = vsyncadd [#allocation9], %s194
          %s196 = sshll.u32 [#allocation8], 4
          %s197 = int_to_ptr.vmem [resolvable:$true] %s196
          %202 = dma.hbm_to_vmem [thread:$0]  %s3, 3072, %s197, [#allocation9], 192, 192, 12
        $region20: #{tpu_custom_call.1} parent=11 // pred_fallthru
          _
        // Predicated region
        $region21: #{tpu_custom_call.1} parent=11 // pred_check
          %p203 = pneg %p136
        $region22: #{tpu_custom_call.1} parent=11 // pred_check_branch
          %205 = sbr.rel (%p203) target = $region24
        $region23: #{tpu_custom_call.1} parent=11 // pred_region
          _
        $region24: #{tpu_custom_call.1} parent=11 // pred_fallthru
          _
      $region12: #{tpu_custom_call.1} parent=5 // pred_fallthru
        _
      %p206 = scmp.lt.s32.totalorder %s21, 8
      // Predicated region
      $region25: #{tpu_custom_call.1} parent=5 // pred_check
        %p207 = pneg %p206
      $region26: #{tpu_custom_call.1} parent=5 // pred_check_branch
        %209 = sbr.rel (%p207) target = $region28
      $region27: #{tpu_custom_call.1} parent=5 // pred_region
        // Predicated region
        $region29: #{tpu_custom_call.1} parent=27 // pred_check
          %p210 = pneg %p41
        $region30: #{tpu_custom_call.1} parent=27 // pred_check_branch
          %212 = sbr.rel (%p210) target = $region32
        $region31: #{tpu_custom_call.1} parent=27 // pred_region
          %s213 = sand.u32 %s31, 1
          %s214 = scalar_lea.sflag [#allocation3], %s213
          %s215 = sand.u32 %s31, 1
          %s216 = smul.addr %s215, 8
          %s217 = scalar_lea.vmem [#allocation2], %s216
          %s219 = ssub.s32 128, 128
          %220 = vsyncadd %s214, %s219
          %s221 = smul.addr %s21, 2
          %s222 = smul.addr %s221, 64
          %s223 = scalar_lea.hbm %s0, %s222
          %s225 = sshll.u32 %s217, 4
          %s226 = int_to_ptr.vmem [resolvable:$true] %s225
          %228 = dma.hbm_to_vmem [thread:$0]  %s223, 128, %s226, %s214
        $region32: #{tpu_custom_call.1} parent=27 // pred_fallthru
          _
        // Predicated region
        $region33: #{tpu_custom_call.1} parent=27 // pred_check
          %p229 = pneg %p67
        $region34: #{tpu_custom_call.1} parent=27 // pred_check_branch
          %231 = sbr.rel (%p229) target = $region36
        $region35: #{tpu_custom_call.1} parent=27 // pred_region
          %s232 = sand.u32 %s21, 1
          %s233 = scalar_lea.sflag [#allocation6], %s232
          %s234 = sand.u32 %s57, 1
          %s235 = smul.addr %s234, 8
          %s236 = scalar_lea.vmem [#allocation5], %s235
          %s238 = ssub.s32 128, 128
          %239 = vsyncadd %s233, %s238
          %s240 = smul.addr %s21, 128
          %s241 = scalar_lea.hbm %s1, %s240
          %s243 = sshll.u32 %s236, 4
          %s244 = int_to_ptr.vmem [resolvable:$true] %s243
          %246 = dma.hbm_to_vmem [thread:$0]  %s241, 128, %s244, %s233
        $region36: #{tpu_custom_call.1} parent=27 // pred_fallthru
          _
      $region28: #{tpu_custom_call.1} parent=5 // pred_fallthru
        _
      %p247 = scmp.le.s32.totalorder 1, %s21
      %p248 = scmp.lt.s32.totalorder %s21, 9
      %p249 = pnand %p247, %p248
      %p250 = pneg %p249
      // Predicated region
      $region37: #{tpu_custom_call.1} parent=5 // pred_check
        _
      $region38: #{tpu_custom_call.1} parent=5 // pred_check_branch
        %252 = sbr.rel (%p249) target = $region40
      $region39: #{tpu_custom_call.1} parent=5 // pred_region
        %s253 = ssub.s32 %s21, 1
        %s254 = sand.u32 %s34, 1
        %s255 = scalar_lea.sflag [#allocation3], %s254
        %s256 = sand.u32 %s34, 1
        %s257 = smul.addr %s256, 8
        %s258 = scalar_lea.vmem [#allocation2], %s257
        // Predicated region
        $region41: #{tpu_custom_call.1} parent=39 // pred_check
          %p259 = pneg %p47
        $region42: #{tpu_custom_call.1} parent=39 // pred_check_branch
          %261 = sbr.rel (%p259) target = $region44
        $region43: #{tpu_custom_call.1} parent=39 // pred_region
          %262 = dma.done %s255, 128
        $region44: #{tpu_custom_call.1} parent=39 // pred_fallthru
          _
        %s263 = sand.u32 %s26, 1
        %s264 = scalar_lea.sflag [#allocation6], %s263
        %s265 = sand.u32 %s60, 1
        %s266 = smul.addr %s265, 8
        %s267 = scalar_lea.vmem [#allocation5], %s266
        // Predicated region
        $region45: #{tpu_custom_call.1} parent=39 // pred_check
          %p268 = pneg %p73
        $region46: #{tpu_custom_call.1} parent=39 // pred_check_branch
          %270 = sbr.rel (%p268) target = $region48
        $region47: #{tpu_custom_call.1} parent=39 // pred_region
          %271 = dma.done %s264, 128
        $region48: #{tpu_custom_call.1} parent=39 // pred_fallthru
          _
        // Predicated region
        $region49: #{tpu_custom_call.1} parent=39 // pred_check
          %p272 = pneg %p94
        $region50: #{tpu_custom_call.1} parent=39 // pred_check_branch
          %274 = sbr.rel (%p272) target = $region52
        $region51: #{tpu_custom_call.1} parent=39 // pred_region
          %275 = dma.done [#allocation6], 1536
        $region52: #{tpu_custom_call.1} parent=39 // pred_fallthru
          _
        // Predicated region
        $region53: #{tpu_custom_call.1} parent=39 // pred_check
          %p276 = pneg %p115
        $region54: #{tpu_custom_call.1} parent=39 // pred_check_branch
          %278 = sbr.rel (%p276) target = $region56
        $region55: #{tpu_custom_call.1} parent=39 // pred_region
          %279 = dma.done [#allocation9], 3072
        $region56: #{tpu_custom_call.1} parent=39 // pred_fallthru
          _
        %s280 = sand.u32 %s34, 1
        %s281 = scalar_lea.sflag [#allocation3], %s280
        %s282 = sand.u32 %s34, 1
        %s283 = smul.addr %s282, 8
        %s284 = scalar_lea.vmem [#allocation2], %s283
        %p285 = pneg %p47
        %p286 = pneg %p44
        %s287 = sand.u32 %s26, 1
        %s288 = scalar_lea.sflag [#allocation6], %s287
        %s289 = sand.u32 %s60, 1
        %s290 = smul.addr %s289, 8
        %s291 = scalar_lea.vmem [#allocation5], %s290
        %p292 = pneg %p73
        %p293 = pneg %p70
        %p294 = pneg %p94
        %p295 = pneg %p91
        %p296 = pneg %p115
        %p297 = pneg %p112
        %p298 = pneg %p136
        %p299 = pneg %p133
        %p300 = pneg %p162
        %p301 = pneg %p159
        %s302 = sand.u32 %s149, 1
        %s303 = scalar_lea.sflag [#allocation4], %s302
        %s304 = sand.u32 %s149, 1
        %s305 = smul.addr %s304, 16
        %s306 = scalar_lea.vmem [#allocation10], %s305
        %v308 = vld [vmem:[%s258] sm:$0xff]
        %v309 = vld [vmem:[%s267] sm:$0xff]
        %v310 = vld [vmem:[%s4] sm:$0x1]
        %v311 = vld [vmem:[%s4 + $0x1] sm:$0x1]
        %v312 = vld [vmem:[%s4 + $0x2] sm:$0x1]
        %v313 = vld [vmem:[%s4 + $0x3] sm:$0x1]
        %v314 = vld [vmem:[%s4 + $0x4] sm:$0x3]
        %v315 = vld [vmem:[#allocation8] sm:$0xf]
        %v316 = vld [vmem:[#allocation8 + $0xc] sm:$0xf]
        %v317 = vld [vmem:[#allocation8 + $0x18] sm:$0xf]
        %v318 = vld [vmem:[#allocation8 + $0x24] sm:$0xf]
        %v319 = vld [vmem:[#allocation8 + $0x30] sm:$0xf]
        %v320 = vld [vmem:[#allocation8 + $0x3c] sm:$0xf]
        %v321 = vld [vmem:[#allocation8 + $0x48] sm:$0xf]
        %v322 = vld [vmem:[#allocation8 + $0x54] sm:$0xf]
        %v323 = vld [vmem:[#allocation8 + $0x60] sm:$0xf]
        %v324 = vld [vmem:[#allocation8 + $0x6c] sm:$0xf]
        %v325 = vld [vmem:[#allocation8 + $0x78] sm:$0xf]
        %v326 = vld [vmem:[#allocation8 + $0x84] sm:$0xf]
        %v327 = vld [vmem:[#allocation8 + $0x90] sm:$0xf]
        %v328 = vld [vmem:[#allocation8 + $0x9c] sm:$0xf]
        %v329 = vld [vmem:[#allocation8 + $0xa8] sm:$0xf]
        %v330 = vld [vmem:[#allocation8 + $0xb4] sm:$0xf]
        %v331 = vld [vmem:[#allocation8 + $0x4] sm:$0xff]
        %v332 = vld [vmem:[#allocation8 + $0x10] sm:$0xff]
        %v333 = vld [vmem:[#allocation8 + $0x1c] sm:$0xff]
        %v334 = vld [vmem:[#allocation8 + $0x28] sm:$0xff]
        %v335 = vld [vmem:[#allocation8 + $0x34] sm:$0xff]
        %v336 = vld [vmem:[#allocation8 + $0x40] sm:$0xff]
        %v337 = vld [vmem:[#allocation8 + $0x4c] sm:$0xff]
        %v338 = vld [vmem:[#allocation8 + $0x58] sm:$0xff]
        %v339 = vld [vmem:[#allocation8 + $0x64] sm:$0xff]
        %v340 = vld [vmem:[#allocation8 + $0x70] sm:$0xff]
        %v341 = vld [vmem:[#allocation8 + $0x7c] sm:$0xff]
        %v342 = vld [vmem:[#allocation8 + $0x88] sm:$0xff]
        %v343 = vld [vmem:[#allocation8 + $0x94] sm:$0xff]
        %v344 = vld [vmem:[#allocation8 + $0xa0] sm:$0xff]
        %v345 = vld [vmem:[#allocation8 + $0xac] sm:$0xff]
        %v346 = vld [vmem:[#allocation8 + $0xb8] sm:$0xff]
        %v347 = vld [vmem:[#allocation7] sm:$0xf]
        %v348 = vld [vmem:[#allocation7 + $0x4] sm:$0xf]
        %v349 = vld [vmem:[#allocation7 + $0x8] sm:$0xf]
        %v350 = vld [vmem:[#allocation7 + $0xc] sm:$0xf]
        %v351 = vld [vmem:[#allocation7 + $0x10] sm:$0xf]
        %v352 = vld [vmem:[#allocation7 + $0x14] sm:$0xf]
        %v353 = vld [vmem:[#allocation7 + $0x18] sm:$0xf]
        %v354 = vld [vmem:[#allocation7 + $0x1c] sm:$0xf]
        %v355 = vld [vmem:[#allocation7 + $0x20] sm:$0xf]
        %v356 = vld [vmem:[#allocation7 + $0x24] sm:$0xf]
        %v357 = vld [vmem:[#allocation7 + $0x28] sm:$0xf]
        %v358 = vld [vmem:[#allocation7 + $0x2c] sm:$0xf]
        %v359 = vld [vmem:[#allocation7 + $0x30] sm:$0xf]
        %v360 = vld [vmem:[#allocation7 + $0x34] sm:$0xf]
        %v361 = vld [vmem:[#allocation7 + $0x38] sm:$0xf]
        %v362 = vld [vmem:[#allocation7 + $0x3c] sm:$0xf]
        %v363 = vld [vmem:[#allocation7 + $0x40] sm:$0xf]
        %v364 = vld [vmem:[#allocation7 + $0x44] sm:$0xf]
        %v365 = vld [vmem:[#allocation7 + $0x48] sm:$0xf]
        %v366 = vld [vmem:[#allocation7 + $0x4c] sm:$0xf]
        %v367 = vld [vmem:[#allocation7 + $0x50] sm:$0xf]
        %v368 = vld [vmem:[#allocation7 + $0x54] sm:$0xf]
        %v369 = vld [vmem:[#allocation7 + $0x58] sm:$0xf]
        %v370 = vld [vmem:[#allocation7 + $0x5c] sm:$0xf]
        %v372 = vunpack.c.l.b16 %v308
        %v373 = vunpack.c.h.b16 %v308
        %v374 = vpack.c.b16 %v372, %v372
        %v375 = vpack.c.b16 %v373, %v373
        %v401 = vunpack.c.l.b16 %v347
        %v402 = vunpack.c.l.b16 %v348
        %v403 = vunpack.c.l.b16 %v349
        %v404 = vunpack.c.l.b16 %v350
        %v405 = vunpack.c.l.b16 %v351
        %v406 = vunpack.c.l.b16 %v352
        %v407 = vunpack.c.l.b16 %v353
        %v408 = vunpack.c.l.b16 %v354
        %v409 = vunpack.c.l.b16 %v355
        %v410 = vunpack.c.l.b16 %v356
        %v411 = vunpack.c.l.b16 %v357
        %v412 = vunpack.c.l.b16 %v358
        %v413 = vunpack.c.l.b16 %v359
        %v414 = vunpack.c.l.b16 %v360
        %v415 = vunpack.c.l.b16 %v361
        %v416 = vunpack.c.l.b16 %v362
        %v417 = vunpack.c.l.b16 %v363
        %v418 = vunpack.c.l.b16 %v364
        %v419 = vunpack.c.l.b16 %v365
        %v420 = vunpack.c.l.b16 %v366
        %v421 = vunpack.c.l.b16 %v367
        %v422 = vunpack.c.l.b16 %v368
        %v423 = vunpack.c.l.b16 %v369
        %v424 = vunpack.c.l.b16 %v370
        %v425 = vpack.c.b16 %v402, %v401
        %v426 = vpack.c.b16 %v404, %v403
        %v427 = vpack.c.b16 %v406, %v405
        %v428 = vpack.c.b16 %v408, %v407
        %v429 = vpack.c.b16 %v410, %v409
        %v430 = vpack.c.b16 %v412, %v411
        %v431 = vpack.c.b16 %v414, %v413
        %v432 = vpack.c.b16 %v416, %v415
        %v433 = vpack.c.b16 %v418, %v417
        %v434 = vpack.c.b16 %v420, %v419
        %v435 = vpack.c.b16 %v422, %v421
        %v436 = vpack.c.b16 %v424, %v423
        %vm449 = vcmask 523264
        %v451 = vsel %vm449, %v375, 0
        %453 = vmatprep.subr.bf16.mxu0 0
        %454 = vmatpush1.bf16.msra.mxu0 %v425
        %455 = vmatprep.subr.bf16.mxu0 0
        %456 = vmatpush1.bf16.msra.mxu0 %v426
        %457 = vmatprep.subr.bf16.mxu0 0
        %458 = vmatpush1.bf16.msra.mxu0 %v427
        %459 = vmatprep.subr.bf16.mxu0 0
        %460 = vmatpush1.bf16.msra.mxu0 %v428
        %461 = vmatprep.subr.bf16.mxu0 0
        %462 = vmatpush1.bf16.msra.mxu0 %v429
        %463 = vmatprep.subr.bf16.mxu0 0
        %464 = vmatpush1.bf16.msra.mxu0 %v430
        %465 = vmatprep.subr.bf16.mxu0 0
        %466 = vmatpush1.bf16.msra.mxu0 %v431
        %467 = vmatprep.subr.bf16.mxu0 0
        %468 = vmatpush1.bf16.msra.mxu0 %v432
        %469 = vmatprep.subr.bf16.mxu0 0
        %470 = vmatpush1.bf16.msra.mxu0 %v433
        %471 = vmatprep.subr.bf16.mxu0 0
        %472 = vmatpush1.bf16.msra.mxu0 %v434
        %473 = vmatprep.subr.bf16.mxu0 0
        %474 = vmatpush1.bf16.msra.mxu0 %v435
        %475 = vmatprep.subr.bf16.mxu0 0
        %476 = vmatpush1.bf16.msra.mxu0 %v436
        %477 = vmatprep.subr.bf16.mxu0 0
        %478 = vmatpush1.bf16.msra.mxu0 0
        %479 = vmatprep.subr.bf16.mxu0 0
        %480 = vmatpush1.bf16.msra.mxu0 0
        %481 = vmatprep.subr.bf16.mxu0 0
        %482 = vmatpush1.bf16.msra.mxu0 0
        %483 = vmatprep.subr.bf16.mxu0 0
        %484 = vmatpush1.bf16.msra.mxu0 0
        %485 = vmatprep.mubr.bf16.mxu0 %v451
        %486 = vmatmul.mubr.bf16.gmra.mrb[0].mxu0 %v374
        %v487 = vpop.f32.mrb[0].mxu0
        %v488 = vadd.f32 0.0, %v487
        %v489 = vpop.f32.mrb[0].mxu0
        %v490 = vpop.f32.mrb[0].mxu0
        %v491 = vpop.f32.mrb[0].mxu0
        %492 = vdwg.mxu0
        %v494 = vlaneseq
        %v495 = vshrl.u32 %v494, 7
        %v496 = vsub.s32 0, %v495
        %v497 = vrot.slane %v312, %v496
        %vm499 = vcmask 64512
        %v501 = vsel %vm499, %v309, 0
        %503 = vmatprep.subr.mxu0 0.0
        %504 = vmatpush1.msra.mxu0 %v488
        %505 = vmatprep.subr.mxu0 0.0
        %506 = vmatpush1.msra.mxu0 0.0
        %507 = vmatprep.subr.mxu0 0.0
        %508 = vmatpush1.msra.mxu0 0.0
        %509 = vmatprep.subr.mxu0 0.0
        %510 = vmatpush1.msra.mxu0 0.0
        %511 = vmatprep.subr.mxu0 0.0
        %512 = vmatpush1.msra.mxu0 0.0
        %513 = vmatprep.subr.mxu0 0.0
        %514 = vmatpush1.msra.mxu0 0.0
        %515 = vmatprep.subr.mxu0 0.0
        %516 = vmatpush1.msra.mxu0 0.0
        %517 = vmatprep.subr.mxu0 0.0
        %518 = vmatpush1.msra.mxu0 0.0
        %519 = vmatprep.subr.mxu0 0.0
        %520 = vmatpush1.msra.mxu0 0.0
        %521 = vmatprep.subr.mxu0 0.0
        %522 = vmatpush1.msra.mxu0 0.0
        %523 = vmatprep.subr.mxu0 0.0
        %524 = vmatpush1.msra.mxu0 0.0
        %525 = vmatprep.subr.mxu0 0.0
        %526 = vmatpush1.msra.mxu0 0.0
        %527 = vmatprep.subr.mxu0 0.0
        %528 = vmatpush1.msra.mxu0 0.0
        %529 = vmatprep.subr.mxu0 0.0
        %530 = vmatpush1.msra.mxu0 0.0
        %531 = vmatprep.subr.mxu0 0.0
        %532 = vmatpush1.msra.mxu0 0.0
        %533 = vmatprep.subr.mxu0 0.0
        %534 = vmatpush1.msra.mxu0 0.0
        %535 = vmatprep.subr.mxu0 0.0
        %536 = vmatpush1.msra.mxu0 0.0
        %537 = vmatprep.subr.mxu0 0.0
        %538 = vmatpush1.msra.mxu0 0.0
        %539 = vmatprep.subr.mxu0 0.0
        %540 = vmatpush1.msra.mxu0 0.0
        %541 = vmatprep.subr.mxu0 0.0
        %542 = vmatpush1.msra.mxu0 0.0
        %543 = vmatprep.subr.mxu0 0.0
        %544 = vmatpush1.msra.mxu0 0.0
        %545 = vmatprep.subr.mxu0 0.0
        %546 = vmatpush1.msra.mxu0 0.0
        %547 = vmatprep.subr.mxu0 0.0
        %548 = vmatpush1.msra.mxu0 0.0
        %549 = vmatprep.subr.mxu0 0.0
        %550 = vmatpush1.msra.mxu0 0.0
        %551 = vmatprep.subr.mxu0 0.0
        %552 = vmatpush1.msra.mxu0 0.0
        %553 = vmatprep.subr.mxu0 0.0
        %554 = vmatpush1.msra.mxu0 0.0
        %555 = vmatprep.subr.mxu0 0.0
        %556 = vmatpush1.msra.mxu0 0.0
        %557 = vmatprep.subr.mxu0 0.0
        %558 = vmatpush1.msra.mxu0 0.0
        %559 = vmatprep.subr.mxu0 0.0
        %560 = vmatpush1.msra.mxu0 0.0
        %561 = vmatprep.subr.mxu0 0.0
        %562 = vmatpush1.msra.mxu0 0.0
        %563 = vmatprep.subr.mxu0 0.0
        %564 = vmatpush1.msra.mxu0 0.0
        %565 = vmatprep.subr.mxu0 0.0
        %566 = vmatpush1.msra.mxu0 0.0
        %567 = vmatprep.mubr.f32.mxu0 0.0
        %568 = vmatmul.mubr.f32.gmra.mrb[0].mxu0 %v501
        %v569 = vpop.f32.mrb[0].mxu0
        %v570 = vadd.f32 %v497, %v569
        %v571 = vpop.f32.mrb[0].mxu0
        %572 = vdwg.mxu0
        %v573 = vpack.c.bf16 %v570, %v570
        %v590 = vunpack.c.l.b16 %v315
        %v591 = vunpack.c.l.b16 %v316
        %v592 = vunpack.c.l.b16 %v317
        %v593 = vunpack.c.l.b16 %v318
        %v594 = vunpack.c.l.b16 %v319
        %v595 = vunpack.c.l.b16 %v320
        %v596 = vunpack.c.l.b16 %v321
        %v597 = vunpack.c.l.b16 %v322
        %v598 = vunpack.c.l.b16 %v323
        %v599 = vunpack.c.l.b16 %v324
        %v600 = vunpack.c.l.b16 %v325
        %v601 = vunpack.c.l.b16 %v326
        %v602 = vunpack.c.l.b16 %v327
        %v603 = vunpack.c.l.b16 %v328
        %v604 = vunpack.c.l.b16 %v329
        %v605 = vunpack.c.l.b16 %v330
        %v606 = vpack.c.b16 %v591, %v590
        %v607 = vpack.c.b16 %v593, %v592
        %v608 = vpack.c.b16 %v595, %v594
        %v609 = vpack.c.b16 %v597, %v596
        %v610 = vpack.c.b16 %v599, %v598
        %v611 = vpack.c.b16 %v601, %v600
        %v612 = vpack.c.b16 %v603, %v602
        %v613 = vpack.c.b16 %v605, %v604
        %622 = vmatprep.subr.bf16.mxu0 0
        %623 = vmatpush1.bf16.msra.mxu0 %v606
        %624 = vmatprep.subr.bf16.mxu0 0
        %625 = vmatpush1.bf16.msra.mxu0 %v607
        %626 = vmatprep.subr.bf16.mxu0 0
        %627 = vmatpush1.bf16.msra.mxu0 %v608
        %628 = vmatprep.subr.bf16.mxu0 0
        %629 = vmatpush1.bf16.msra.mxu0 %v609
        %630 = vmatprep.subr.bf16.mxu0 0
        %631 = vmatpush1.bf16.msra.mxu0 %v610
        %632 = vmatprep.subr.bf16.mxu0 0
        %633 = vmatpush1.bf16.msra.mxu0 %v611
        %634 = vmatprep.subr.bf16.mxu0 0
        %635 = vmatpush1.bf16.msra.mxu0 %v612
        %636 = vmatprep.subr.bf16.mxu0 0
        %637 = vmatpush1.bf16.msra.mxu0 %v613
        %638 = vmatprep.subr.bf16.mxu0 0
        %639 = vmatpush1.bf16.msra.mxu0 0
        %640 = vmatprep.subr.bf16.mxu0 0
        %641 = vmatpush1.bf16.msra.mxu0 0
        %642 = vmatprep.subr.bf16.mxu0 0
        %643 = vmatpush1.bf16.msra.mxu0 0
        %644 = vmatprep.subr.bf16.mxu0 0
        %645 = vmatpush1.bf16.msra.mxu0 0
        %646 = vmatprep.subr.bf16.mxu0 0
        %647 = vmatpush1.bf16.msra.mxu0 0
        %648 = vmatprep.subr.bf16.mxu0 0
        %649 = vmatpush1.bf16.msra.mxu0 0
        %650 = vmatprep.subr.bf16.mxu0 0
        %651 = vmatpush1.bf16.msra.mxu0 0
        %652 = vmatprep.subr.bf16.mxu0 0
        %653 = vmatpush1.bf16.msra.mxu0 0
        %654 = vmatprep.mubr.bf16.mxu0 0
        %655 = vmatmul.mubr.bf16.gmra.mrb[0].mxu0 %v573
        %v656 = vpop.f32.mrb[0].mxu0
        %v657 = vadd.f32 0.0, %v656
        %v658 = vpop.f32.mrb[0].mxu0
        %v659 = vpop.f32.mrb[0].mxu0
        %v660 = vpop.f32.mrb[0].mxu0
        %661 = vdwg.mxu0
        %v663 = vlaneseq
        %v664 = vshrl.u32 %v663, 7
        %v665 = vsub.s32 0, %v664
        %v666 = vrot.slane %v311, %v665
        %v668 = vmul.f32 %v657, %v666
        %669 = vadd.xlane.f32.xlu0 %v668
        %v670 = vpop.xlane.xlu0 %669
        %v672 = vlaneseq
        %v673 = vshrl.u32 %v672, 7
        %v674 = vsub.s32 0, %v673
        %v675 = vrot.slane %v310, %v674
        %v677 = vmul.f32 %v657, %v675
        %678 = vadd.xlane.f32.xlu0 %v677
        %v679 = vpop.xlane.xlu0 %678
        %680 = vxpose.xlu0.b32.start [1/16] %v679, 128
        %681 = vxpose.xlu0.b32.cont [2/16] 0.0, 128
        %682 = vxpose.xlu0.b32.cont [3/16] 0.0, 128
        %683 = vxpose.xlu0.b32.cont [4/16] 0.0, 128
        %684 = vxpose.xlu0.b32.cont [5/16] 0.0, 128
        %685 = vxpose.xlu0.b32.cont [6/16] 0.0, 128
        %686 = vxpose.xlu0.b32.cont [7/16] 0.0, 128
        %687 = vxpose.xlu0.b32.cont [8/16] 0.0, 128
        %688 = vxpose.xlu0.b32.cont [9/16] 0.0, 128
        %689 = vxpose.xlu0.b32.cont [10/16] 0.0, 128
        %690 = vxpose.xlu0.b32.cont [11/16] 0.0, 128
        %691 = vxpose.xlu0.b32.cont [12/16] 0.0, 128
        %692 = vxpose.xlu0.b32.cont [13/16] 0.0, 128
        %693 = vxpose.xlu0.b32.cont [14/16] 0.0, 128
        %694 = vxpose.xlu0.b32.cont [15/16] 0.0, 128
        %695 = vxpose.xlu0.b32.end [16/16] 0.0, 128
        %v696 = vpop.trf.xlu0
        %v697 = vpop.trf.xlu0
        %v698 = vpop.trf.xlu0
        %v699 = vpop.trf.xlu0
        %v700 = vpop.trf.xlu0
        %v701 = vpop.trf.xlu0
        %v702 = vpop.trf.xlu0
        %v703 = vpop.trf.xlu0
        %v704 = vpop.trf.xlu0
        %v705 = vpop.trf.xlu0
        %v706 = vpop.trf.xlu0
        %v707 = vpop.trf.xlu0
        %v708 = vpop.trf.xlu0
        %v709 = vpop.trf.xlu0
        %v710 = vpop.trf.xlu0
        %v711 = vpop.trf.xlu0
        %v712 = vlaneseq
        %v713 = vshrl.u32 %v712, 7
        %v714 = vsub.s32 0, %v713
        %v715 = vrot.slane %v696, %v714
        %v716 = vadd.f32 %v670, %v715
        %vm717 = vcmp.gt.f32.partialorder %v716, 0.0
        %v718 = vmul.f32 %v716, 0.2
        %v719 = vsel %vm717, %v716, %v718
        %vm720 = vcmp.gt.f32.partialorder %v309, 0.0
        %v721 = vsel %vm720, %v719, -1e+30
        %v722 = vsel %vm499, %v721, -inf
        %723 = vmax.xlane.f32.xlu0 %v722
        %v724 = vpop.xlane.xlu0 %723
        %v725 = vsub.f32 %v721, %v724
        %v726 = vmul.f32 %v725, 1.442695
        %v727 = vpow.pop %v726
        %v728 = vsel %vm499, %v727, 0.0
        %729 = vadd.xlane.f32.xlu0 %v728
        %v730 = vpop.xlane.xlu0 %729
        %v731 = vrcp.pop %v730
        %v732 = vmul.f32 %v727, %v731
        %v734 = vlaneseq
        %v735 = vshrl.u32 %v734, 7
        %v736 = vsub.s32 0, %v735
        %v737 = vrot.slane %v313, %v736
        %v740 = vsel %vm499, %v732, 0
        %742 = vmatprep.subr.mxu0 0.0
        %743 = vmatpush1.msra.mxu0 %v657
        %744 = vmatprep.subr.mxu0 0.0
        %745 = vmatpush1.msra.mxu0 0.0
        %746 = vmatprep.subr.mxu0 0.0
        %747 = vmatpush1.msra.mxu0 0.0
        %748 = vmatprep.subr.mxu0 0.0
        %749 = vmatpush1.msra.mxu0 0.0
        %750 = vmatprep.subr.mxu0 0.0
        %751 = vmatpush1.msra.mxu0 0.0
        %752 = vmatprep.subr.mxu0 0.0
        %753 = vmatpush1.msra.mxu0 0.0
        %754 = vmatprep.subr.mxu0 0.0
        %755 = vmatpush1.msra.mxu0 0.0
        %756 = vmatprep.subr.mxu0 0.0
        %757 = vmatpush1.msra.mxu0 0.0
        %758 = vmatprep.subr.mxu0 0.0
        %759 = vmatpush1.msra.mxu0 0.0
        %760 = vmatprep.subr.mxu0 0.0
        %761 = vmatpush1.msra.mxu0 0.0
        %762 = vmatprep.subr.mxu0 0.0
        %763 = vmatpush1.msra.mxu0 0.0
        %764 = vmatprep.subr.mxu0 0.0
        %765 = vmatpush1.msra.mxu0 0.0
        %766 = vmatprep.subr.mxu0 0.0
        %767 = vmatpush1.msra.mxu0 0.0
        %768 = vmatprep.subr.mxu0 0.0
        %769 = vmatpush1.msra.mxu0 0.0
        %770 = vmatprep.subr.mxu0 0.0
        %771 = vmatpush1.msra.mxu0 0.0
        %772 = vmatprep.subr.mxu0 0.0
        %773 = vmatpush1.msra.mxu0 0.0
        %774 = vmatprep.subr.mxu0 0.0
        %775 = vmatpush1.msra.mxu0 0.0
        %776 = vmatprep.subr.mxu0 0.0
        %777 = vmatpush1.msra.mxu0 0.0
        %778 = vmatprep.subr.mxu0 0.0
        %779 = vmatpush1.msra.mxu0 0.0
        %780 = vmatprep.subr.mxu0 0.0
        %781 = vmatpush1.msra.mxu0 0.0
        %782 = vmatprep.subr.mxu0 0.0
        %783 = vmatpush1.msra.mxu0 0.0
        %784 = vmatprep.subr.mxu0 0.0
        %785 = vmatpush1.msra.mxu0 0.0
        %786 = vmatprep.subr.mxu0 0.0
        %787 = vmatpush1.msra.mxu0 0.0
        %788 = vmatprep.subr.mxu0 0.0
        %789 = vmatpush1.msra.mxu0 0.0
        %790 = vmatprep.subr.mxu0 0.0
        %791 = vmatpush1.msra.mxu0 0.0
        %792 = vmatprep.subr.mxu0 0.0
        %793 = vmatpush1.msra.mxu0 0.0
        %794 = vmatprep.subr.mxu0 0.0
        %795 = vmatpush1.msra.mxu0 0.0
        %796 = vmatprep.subr.mxu0 0.0
        %797 = vmatpush1.msra.mxu0 0.0
        %798 = vmatprep.subr.mxu0 0.0
        %799 = vmatpush1.msra.mxu0 0.0
        %800 = vmatprep.subr.mxu0 0.0
        %801 = vmatpush1.msra.mxu0 0.0
        %802 = vmatprep.subr.mxu0 0.0
        %803 = vmatpush1.msra.mxu0 0.0
        %804 = vmatprep.subr.mxu0 0.0
        %805 = vmatpush1.msra.mxu0 0.0
        %806 = vmatprep.mubr.f32.mxu0 0.0
        %807 = vmatmul.mubr.f32.gmra.mrb[0].mxu0 %v740
        %v808 = vpop.f32.mrb[0].mxu0
        %v809 = vadd.f32 %v737, %v808
        %v810 = vpop.f32.mrb[0].mxu0
        %811 = vdwg.mxu0
        %v812 = vmax.f32 %v809, 0.0
        %v813 = vpack.c.bf16 %v812, %v812
        %v830 = vunpack.c.l.b16 %v331
        %v831 = vunpack.c.h.b16 %v331
        %v832 = vunpack.c.l.b16 %v332
        %v833 = vunpack.c.h.b16 %v332
        %v834 = vunpack.c.l.b16 %v333
        %v835 = vunpack.c.h.b16 %v333
        %v836 = vunpack.c.l.b16 %v334
        %v837 = vunpack.c.h.b16 %v334
        %v838 = vunpack.c.l.b16 %v335
        %v839 = vunpack.c.h.b16 %v335
        %v840 = vunpack.c.l.b16 %v336
        %v841 = vunpack.c.h.b16 %v336
        %v842 = vunpack.c.l.b16 %v337
        %v843 = vunpack.c.h.b16 %v337
        %v844 = vunpack.c.l.b16 %v338
        %v845 = vunpack.c.h.b16 %v338
        %v846 = vunpack.c.l.b16 %v339
        %v847 = vunpack.c.h.b16 %v339
        %v848 = vunpack.c.l.b16 %v340
        %v849 = vunpack.c.h.b16 %v340
        %v850 = vunpack.c.l.b16 %v341
        %v851 = vunpack.c.h.b16 %v341
        %v852 = vunpack.c.l.b16 %v342
        %v853 = vunpack.c.h.b16 %v342
        %v854 = vunpack.c.l.b16 %v343
        %v855 = vunpack.c.h.b16 %v343
        %v856 = vunpack.c.l.b16 %v344
        %v857 = vunpack.c.h.b16 %v344
        %v858 = vunpack.c.l.b16 %v345
        %v859 = vunpack.c.h.b16 %v345
        %v860 = vunpack.c.l.b16 %v346
        %v861 = vunpack.c.h.b16 %v346
        %v862 = vpack.c.b16 %v832, %v830
        %v863 = vpack.c.b16 %v833, %v831
        %v864 = vpack.c.b16 %v836, %v834
        %v865 = vpack.c.b16 %v837, %v835
        %v866 = vpack.c.b16 %v840, %v838
        %v867 = vpack.c.b16 %v841, %v839
        %v868 = vpack.c.b16 %v844, %v842
        %v869 = vpack.c.b16 %v845, %v843
        %v870 = vpack.c.b16 %v848, %v846
        %v871 = vpack.c.b16 %v849, %v847
        %v872 = vpack.c.b16 %v852, %v850
        %v873 = vpack.c.b16 %v853, %v851
        %v874 = vpack.c.b16 %v856, %v854
        %v875 = vpack.c.b16 %v857, %v855
        %v876 = vpack.c.b16 %v860, %v858
        %v877 = vpack.c.b16 %v861, %v859
        %894 = vmatprep.subr.bf16.mxu0 %v863
        %895 = vmatpush1.bf16.msra.mxu0 %v862
        %896 = vmatprep.subr.bf16.mxu0 %v865
        %897 = vmatpush1.bf16.msra.mxu0 %v864
        %898 = vmatprep.subr.bf16.mxu0 %v867
        %899 = vmatpush1.bf16.msra.mxu0 %v866
        %900 = vmatprep.subr.bf16.mxu0 %v869
        %901 = vmatpush1.bf16.msra.mxu0 %v868
        %902 = vmatprep.subr.bf16.mxu0 %v871
        %903 = vmatpush1.bf16.msra.mxu0 %v870
        %904 = vmatprep.subr.bf16.mxu0 %v873
        %905 = vmatpush1.bf16.msra.mxu0 %v872
        %906 = vmatprep.subr.bf16.mxu0 %v875
        %907 = vmatpush1.bf16.msra.mxu0 %v874
        %908 = vmatprep.subr.bf16.mxu0 %v877
        %909 = vmatpush1.bf16.msra.mxu0 %v876
        %910 = vmatprep.subr.bf16.mxu0 0
        %911 = vmatpush1.bf16.msra.mxu0 0
        %912 = vmatprep.subr.bf16.mxu0 0
        %913 = vmatpush1.bf16.msra.mxu0 0
        %914 = vmatprep.subr.bf16.mxu0 0
        %915 = vmatpush1.bf16.msra.mxu0 0
        %916 = vmatprep.subr.bf16.mxu0 0
        %917 = vmatpush1.bf16.msra.mxu0 0
        %918 = vmatprep.subr.bf16.mxu0 0
        %919 = vmatpush1.bf16.msra.mxu0 0
        %920 = vmatprep.subr.bf16.mxu0 0
        %921 = vmatpush1.bf16.msra.mxu0 0
        %922 = vmatprep.subr.bf16.mxu0 0
        %923 = vmatpush1.bf16.msra.mxu0 0
        %924 = vmatprep.subr.bf16.mxu0 0
        %925 = vmatpush1.bf16.msra.mxu0 0
        %926 = vmatprep.mubr.bf16.mxu0 0
        %927 = vmatmul.mubr.bf16.gmra.mrb[0].mxu0 %v813
        %v928 = vpop.f32.mrb[0].mxu0
        %v929 = vadd.f32 0.0, %v928
        %v930 = vpop.f32.mrb[0].mxu0
        %v931 = vadd.f32 0.0, %v930
        %v932 = vpop.f32.mrb[0].mxu0
        %v933 = vpop.f32.mrb[0].mxu0
        %934 = vdwg.mxu0
        %v936 = vlaneseq
        %v937 = vshrl.u32 %v936, 7
        %v938 = vsub.s32 0, %v937
        %v939 = vrot.slane %v314, %v938
        %v940 = vlaneseq
        %v941 = vshrl.u32 %v940, 7
        %v942 = vsub.s32 1, %v941
        %v943 = vrot.slane %v314, %v942
        %946 = vmatprep.subr.mxu0 %v931
        %947 = vmatpush1.msra.mxu0 %v929
        %948 = vmatprep.subr.mxu0 0.0
        %949 = vmatpush1.msra.mxu0 0.0
        %950 = vmatprep.subr.mxu0 0.0
        %951 = vmatpush1.msra.mxu0 0.0
        %952 = vmatprep.subr.mxu0 0.0
        %953 = vmatpush1.msra.mxu0 0.0
        %954 = vmatprep.subr.mxu0 0.0
        %955 = vmatpush1.msra.mxu0 0.0
        %956 = vmatprep.subr.mxu0 0.0
        %957 = vmatpush1.msra.mxu0 0.0
        %958 = vmatprep.subr.mxu0 0.0
        %959 = vmatpush1.msra.mxu0 0.0
        %960 = vmatprep.subr.mxu0 0.0
        %961 = vmatpush1.msra.mxu0 0.0
        %962 = vmatprep.subr.mxu0 0.0
        %963 = vmatpush1.msra.mxu0 0.0
        %964 = vmatprep.subr.mxu0 0.0
        %965 = vmatpush1.msra.mxu0 0.0
        %966 = vmatprep.subr.mxu0 0.0
        %967 = vmatpush1.msra.mxu0 0.0
        %968 = vmatprep.subr.mxu0 0.0
        %969 = vmatpush1.msra.mxu0 0.0
        %970 = vmatprep.subr.mxu0 0.0
        %971 = vmatpush1.msra.mxu0 0.0
        %972 = vmatprep.subr.mxu0 0.0
        %973 = vmatpush1.msra.mxu0 0.0
        %974 = vmatprep.subr.mxu0 0.0
        %975 = vmatpush1.msra.mxu0 0.0
        %976 = vmatprep.subr.mxu0 0.0
        %977 = vmatpush1.msra.mxu0 0.0
        %978 = vmatprep.subr.mxu0 0.0
        %979 = vmatpush1.msra.mxu0 0.0
        %980 = vmatprep.subr.mxu0 0.0
        %981 = vmatpush1.msra.mxu0 0.0
        %982 = vmatprep.subr.mxu0 0.0
        %983 = vmatpush1.msra.mxu0 0.0
        %984 = vmatprep.subr.mxu0 0.0
        %985 = vmatpush1.msra.mxu0 0.0
        %986 = vmatprep.subr.mxu0 0.0
        %987 = vmatpush1.msra.mxu0 0.0
        %988 = vmatprep.subr.mxu0 0.0
        %989 = vmatpush1.msra.mxu0 0.0
        %990 = vmatprep.subr.mxu0 0.0
        %991 = vmatpush1.msra.mxu0 0.0
        %992 = vmatprep.subr.mxu0 0.0
        %993 = vmatpush1.msra.mxu0 0.0
        %994 = vmatprep.subr.mxu0 0.0
        %995 = vmatpush1.msra.mxu0 0.0
        %996 = vmatprep.subr.mxu0 0.0
        %997 = vmatpush1.msra.mxu0 0.0
        %998 = vmatprep.subr.mxu0 0.0
        %999 = vmatpush1.msra.mxu0 0.0
        %1000 = vmatprep.subr.mxu0 0.0
        %1001 = vmatpush1.msra.mxu0 0.0
        %1002 = vmatprep.subr.mxu0 0.0
        %1003 = vmatpush1.msra.mxu0 0.0
        %1004 = vmatprep.subr.mxu0 0.0
        %1005 = vmatpush1.msra.mxu0 0.0
        %1006 = vmatprep.subr.mxu0 0.0
        %1007 = vmatpush1.msra.mxu0 0.0
        %1008 = vmatprep.subr.mxu0 0.0
        %1009 = vmatpush1.msra.mxu0 0.0
        %1010 = vmatprep.mubr.f32.mxu0 0.0
        %1011 = vmatmul.mubr.f32.gmra.mrb[0].mxu0 %v501
        %v1012 = vpop.f32.mrb[0].mxu0
        %v1013 = vadd.f32 %v939, %v1012
        %v1014 = vpop.f32.mrb[0].mxu0
        %v1015 = vadd.f32 %v943, %v1014
        %1016 = vdwg.mxu0
        %1017 = vst [vmem:[%s306] sm:$0xff] %v1013
        %1018 = vst [vmem:[%s306 + $0x8] sm:$0xff] %v1015
        %s1019 = sand.u32 %s149, 1
        %s1020 = scalar_lea.sflag [#allocation4], %s1019
        %s1021 = sand.u32 %s149, 1
        %s1022 = smul.addr %s1021, 16
        %s1023 = scalar_lea.vmem [#allocation10], %s1022
        // Predicated region
        $region57: #{tpu_custom_call.1} parent=39 // pred_check
          %p1024 = pneg %p159
        $region58: #{tpu_custom_call.1} parent=39 // pred_check_branch
          %1026 = sbr.rel (%p1024) target = $region60
        $region59: #{tpu_custom_call.1} parent=39 // pred_region
          %s1028 = ssub.s32 256, 256
          %1029 = vsyncadd %s1020, %s1028
          %s1030 = smul.addr %s26, 2
          %s1031 = smul.addr %s1030, 128
          %s1032 = scalar_lea.hbm %s5, %s1031
          %s1034 = sshll.u32 %s1023, 4
          %s1035 = int_to_ptr.vmem [resolvable:$true] %s1034
          %1037 = dma.vmem_to_hbm [thread:$0]  %s1035, 256, %s1032, %s1020
        $region60: #{tpu_custom_call.1} parent=39 // pred_fallthru
          _
      $region40: #{tpu_custom_call.1} parent=5 // pred_fallthru
        _
      %p1038 = scmp.le.s32.totalorder 2, %s21
      // Predicated region
      $region61: #{tpu_custom_call.1} parent=5 // pred_check
        %p1039 = pneg %p1038
      $region62: #{tpu_custom_call.1} parent=5 // pred_check_branch
        %1041 = sbr.rel (%p1039) target = $region64
      $region63: #{tpu_custom_call.1} parent=5 // pred_region
        %s1042 = ssub.s32 %s21, 2
        // Predicated region
        $region65: #{tpu_custom_call.1} parent=63 // pred_check
          %p1043 = pneg %p165
        $region66: #{tpu_custom_call.1} parent=63 // pred_check_branch
          %1045 = sbr.rel (%p1043) target = $region68
        $region67: #{tpu_custom_call.1} parent=63 // pred_region
          %s1046 = sand.u32 %s150, 1
          %s1047 = scalar_lea.sflag [#allocation4], %s1046
          %s1048 = sand.u32 %s150, 1
          %s1049 = smul.addr %s1048, 16
          %s1050 = scalar_lea.vmem [#allocation10], %s1049
          %1051 = dma.done %s1047, 256
        $region68: #{tpu_custom_call.1} parent=63 // pred_fallthru
          _
      $region64: #{tpu_custom_call.1} parent=5 // pred_fallthru
        _
    $region6: #{tpu_custom_call.1} parent=1 // loop_footer
      %s25 = sadd.s32 1, %s21
    $region7: #{tpu_custom_call.1} parent=1 // loop_footer_branch
      %20 = sbr.rel target = $region3
    $region8: #{tpu_custom_call.1} parent=1 // loop_exit
      _
    %1052 = vsyncpa [#allocation3], 1
    %s1053 = scalar_lea.sflag [#allocation3], 1
    %1054 = vsyncpa %s1053, 1
    %1055 = vsyncpa [#allocation6], 1
    %s1056 = scalar_lea.sflag [#allocation6], 1
    %1057 = vsyncpa %s1056, 1
    %1058 = vsyncpa [#allocation9], 1
    %1059 = vsyncpa [#allocation4], 1
    %s1060 = scalar_lea.sflag [#allocation4], 1
    %1061 = vsyncpa %s1060, 1

</llo_original>
